<compile_context>
chip_gen: v7x
topology: tpu7x:2x2x1
jax: 0.10.0
libtpu: 0.0.40
codegen_flags: <defaults>
</compile_context>

<pallas_src>
import math

import jax
import jax.numpy as jnp
from jax.experimental import pallas as pl
from jax.experimental.pallas import tpu as pltpu

_LANE = 128
_SUBLANE = 8


def _fused_classifier_kernel(u_ref, wf_ref, bf_ref, o_ref):
    # Single fused layer: (TB, K) @ (K, n_pad) + (1, n_pad), f32 accumulation.
    acc = jnp.dot(u_ref[...], wf_ref[...], preferred_element_type=jnp.float32)
    acc = acc + bf_ref[...]
    o_ref[...] = acc.astype(o_ref.dtype)


def _round_up(x, m):
    return -(-x // m) * m


def _vmem_capacity_bytes():
    """Physical VMEM per TensorCore; conservative (v7x) fallback if unknown."""
    try:
        return int(pltpu.get_tpu_info().vmem_capacity_bytes)
    except Exception:
        return 64 * 1024 * 1024


def _pick_batch_tile(b_rows, k_pad, n_pad, in_itemsize, out_itemsize, sub,
                     max_tile, vmem_budget):
    """Batch tile such that resident fused weights + double-buffered u/out tiles
    fit the per-generation VMEM budget, with >=2 grid steps when possible."""
    # Fused weight + bias kept resident (single-buffered when Buffered(1) applies;
    # assume worst case of 2 copies to stay conservative).
    weight_bytes = 2 * (k_pad * n_pad * in_itemsize + n_pad * 4)
    avail = max(vmem_budget - weight_bytes, 1 << 20)
    # u tile + out tile, each double-buffered by the pipeline.
    per_row = 2 * (k_pad * in_itemsize + n_pad * out_itemsize)
    tb = int(avail // per_row)
    tb = min(max_tile, tb, _round_up(b_rows, sub))
    # Keep >= 2 grid steps when the batch allows it so v7x's two TensorCores
    # both get work under dimension_semantics=("parallel",).
    if b_rows > sub:
        half = _round_up(-(-b_rows // 2), sub)
        tb = min(tb, half)
    tb = max(sub, (tb // sub) * sub)
    return tb


def classification_net_forward(u, w1, b1, w2, b2, *, use_bf16=False, max_block_b=1024):
    """Pallas implementation of ClassificationNet.forward applied to the encoder
    output `u`.

    u  : (B, inputdim) float32
    w1 : (inputdim, 512), b1 : (1, 512)
    w2 : (512, n_classes), b2 : (1, n_classes)
    returns (B, n_classes) float32
    """
    B, inputdim = u.shape
    n_classes = w2.shape[1]

    # ---- algebraic fusion of the two affine layers (f32 precompute) -----------
    wf = jnp.dot(w1, w2, preferred_element_type=jnp.float32)          # (inputdim, n_classes)
    bf = jnp.dot(b1, w2, preferred_element_type=jnp.float32) + b2     # (1, n_classes)

    # ---- lane-dense output: pad n_classes up to a multiple of 128 -------------
    n_pad = _round_up(max(n_classes, _LANE), _LANE)
    if n_pad != n_classes:
        wf = jnp.pad(wf, ((0, 0), (0, n_pad - n_classes)))
        bf = jnp.pad(bf, ((0, 0), (0, n_pad - n_classes)))

    # ---- dtypes: optional bf16 inputs/weights/output, f32 bias & accumulation -
    compute_dtype = jnp.bfloat16 if use_bf16 else jnp.float32
    out_dtype = compute_dtype
    in_itemsize = jnp.dtype(compute_dtype).itemsize
    out_itemsize = jnp.dtype(out_dtype).itemsize
    sub = 16 if use_bf16 else _SUBLANE   # sublane packing granularity

    u_c = u.astype(compute_dtype)

    # ---- lane-dense K: pad inputdim up to a multiple of 128 (no-op at 4096) ---
    k_pad = _round_up(max(inputdim, _LANE), _LANE)
    if k_pad != inputdim:
        u_c = jnp.pad(u_c, ((0, 0), (0, k_pad - inputdim)))
        wf = jnp.pad(wf, ((0, k_pad - inputdim), (0, 0)))

    wf_c = wf.astype(compute_dtype)
    bf_c = bf.astype(jnp.float32)

    # ---- per-generation VMEM budgets -------------------------------------------
    vmem_cap = _vmem_capacity_bytes()
    vmem_limit = min((vmem_cap * 3) // 4, 96 * 1024 * 1024)   # 48 MiB v7x, 96 MiB v5e/v6e
    tile_budget = max(vmem_limit - (4 << 20), 8 << 20)        # headroom for Mosaic scratch

    tb = _pick_batch_tile(B, k_pad, n_pad, in_itemsize, out_itemsize, sub,
                          max_tile=max_block_b, vmem_budget=tile_budget)
    b_pad = _round_up(B, tb)
    if b_pad != B:
        u_c = jnp.pad(u_c, ((0, b_pad - B), (0, 0)))
    grid = (b_pad // tb,)

    flops = 2 * b_pad * k_pad * n_pad
    bytes_accessed = (
        b_pad * k_pad * in_itemsize        # u
        + k_pad * n_pad * in_itemsize      # Wf (resident)
        + n_pad * 4                        # bf
        + b_pad * n_pad * out_itemsize     # output
    )

    def _run(single_buffer_weights):
        const_kwargs = {}
        if single_buffer_weights:
            const_kwargs = dict(pipeline_mode=pl.Buffered(1))
        return pl.pallas_call(
            _fused_classifier_kernel,
            out_shape=jax.ShapeDtypeStruct((b_pad, n_pad), out_dtype),
            grid_spec=pltpu.PrefetchScalarGridSpec(
                num_scalar_prefetch=0,
                grid=grid,
                in_specs=[
                    pl.BlockSpec((tb, k_pad), lambda i: (i, 0)),                 # u tile (streamed)
                    pl.BlockSpec((k_pad, n_pad), lambda i: (0, 0), **const_kwargs),  # Wf (resident)
                    pl.BlockSpec((1, n_pad), lambda i: (0, 0), **const_kwargs),      # bf (resident)
                ],
                out_specs=pl.BlockSpec((tb, n_pad), lambda i: (i, 0)),
            ),
            compiler_params=pltpu.CompilerParams(
                dimension_semantics=("parallel",),
                vmem_limit_bytes=int(vmem_limit),
            ),
            cost_estimate=pl.CostEstimate(
                flops=flops, transcendentals=0, bytes_accessed=bytes_accessed),
        )(u_c, wf_c, bf_c)

    try:
        out = _run(True)
    except Exception:
        # Fallback: default double-buffering if single-buffered constant specs
        # are not supported by the installed JAX/Mosaic version.
        out = _run(False)

    # Strip batch/class padding and return f32 logits.
    return out[:B, :n_classes].astype(jnp.float32)


def init_params(key, inputdim, fc_hidden, n_classes):
    """Deterministic PyTorch-style nn.Linear init (uniform +/- 1/sqrt(fan_in))."""
    k1, k2, k3, k4 = jax.random.split(key, 4)
    bound1 = 1.0 / math.sqrt(inputdim)
    bound2 = 1.0 / math.sqrt(fc_hidden)
    w1 = jax.random.uniform(k1, (inputdim, fc_hidden), jnp.float32, -bound1, bound1)
    b1 = jax.random.uniform(k2, (1, fc_hidden), jnp.float32, -bound1, bound1)
    w2 = jax.random.uniform(k3, (fc_hidden, n_classes), jnp.float32, -bound2, bound2)
    b2 = jax.random.uniform(k4, (1, n_classes), jnp.float32, -bound2, bound2)
    return w1, b1, w2, b2


if __name__ == "__main__":
    # Small config consistent with the module's __init__:
    config = dict(
        nonlinear_fc=0,
        fc_dim=512,
        n_classes=3,
        enc_lstm_dim=32,
        encoder_type="BLSTMEncoder",   # default branch: inputdim = 2 * enc_lstm_dim
        dpout_fc=0.0,
    )
    enc_lstm_dim = config["enc_lstm_dim"]
    inputdim = 2 * enc_lstm_dim          # 64
    fc_hidden = 512                      # hardcoded 512 in the module's classifier
    n_classes = config["n_classes"]      # 3
    batch = 8

    key = jax.random.PRNGKey(0)
    k_u, k_p = jax.random.split(key)
    # Encoded sentence representation u (output of the external encoder).
    u = jax.random.normal(k_u, (batch, inputdim), dtype=jnp.float32)
    w1, b1, w2, b2 = init_params(k_p, inputdim, fc_hidden, n_classes)

    # Plain JAX reference of the unfused module math.
    ref = (u @ w1 + b1) @ w2 + b2

    # f32 path (fused weights): tight tolerance.
    out_f32 = classification_net_forward(u, w1, b1, w2, b2, use_bf16=False)
    out_f32 = jax.block_until_ready(out_f32)
    assert out_f32.shape == (batch, n_classes)
    assert jnp.allclose(out_f32, ref, atol=1e-3, rtol=1e-3)

    # bf16 compute/output path (f32 accumulation): looser tolerance.
    out_bf16 = classification_net_forward(u, w1, b1, w2, b2, use_bf16=True)
    out_bf16 = jax.block_until_ready(out_bf16)
    assert out_bf16.shape == (batch, n_classes)
    assert jnp.allclose(out_bf16, ref, atol=5e-2, rtol=5e-2)

    print("KERNEL_OK")
</pallas_src>

<mosaic_0001>
module attributes {stable_mosaic.version = 11 : i64} {
  func.func @_fused_classifier_kernel(%arg0: i32, %arg1: memref<8x128xf32, #tpu.memory_space<vmem>>, %arg2: memref<128x128xf32, #tpu.memory_space<vmem>>, %arg3: memref<1x128xf32, #tpu.memory_space<vmem>>, %arg4: memref<8x128xf32, #tpu.memory_space<vmem>>) attributes {dimension_semantics = [#tpu.dimension_semantics<parallel>], iteration_bounds = array<i64: 1>, scalar_prefetch = 0 : i64, scratch_operands = 0 : i64, tpu.core_type = #tpu.core_type<tc>, window_params = [{transform_indices = @transform_0, window_bounds = array<i64: 8, 128>}, {pipeline_mode = #tpu.pipeline_mode<synchronous>, transform_indices = @transform_1, window_bounds = array<i64: 128, 128>}, {pipeline_mode = #tpu.pipeline_mode<synchronous>, transform_indices = @transform_2, window_bounds = array<i64: 1, 128>}, {transform_indices = @transform_3, window_bounds = array<i64: 8, 128>}]} {
    %c0 = arith.constant 0 : index
    %c0_0 = arith.constant 0 : index
    %0 = vector.load %arg1[%c0, %c0_0] : memref<8x128xf32, #tpu.memory_space<vmem>>, vector<8x128xf32>
    %c0_1 = arith.constant 0 : index
    %c0_2 = arith.constant 0 : index
    %1 = vector.load %arg2[%c0_1, %c0_2] : memref<128x128xf32, #tpu.memory_space<vmem>>, vector<128x128xf32>
    %cst = arith.constant dense<0.000000e+00> : vector<8x128xf32>
    %2 = tpu.matmul %0, %1, %cst {dimension_numbers = #tpu.dot_dimension_numbers<[1], [0], [0], [1], [0, 0, 1, 1], [], []>} : vector<8x128xf32>, vector<128x128xf32>, vector<8x128xf32> -> vector<8x128xf32>
    %c0_3 = arith.constant 0 : index
    %c0_4 = arith.constant 0 : index
    %3 = vector.load %arg3[%c0_3, %c0_4] : memref<1x128xf32, #tpu.memory_space<vmem>>, vector<1x128xf32>
    %4 = vector.broadcast %3 : vector<1x128xf32> to vector<8x128xf32>
    %5 = arith.addf %2, %4 : vector<8x128xf32>
    %c0_5 = arith.constant 0 : index
    %c0_6 = arith.constant 0 : index
    %6 = vector.load %arg4[%c0_5, %c0_6] : memref<8x128xf32, #tpu.memory_space<vmem>>, vector<8x128xf32>
    tpu.vector_store %arg4[%c0_5, %c0_6], %5 {strides = array<i32>} : memref<8x128xf32, #tpu.memory_space<vmem>>, vector<8x128xf32>,
    return
  }
  func.func @transform_0(%arg0: i32) -> (i32, i32) {
    %c0_i32 = arith.constant 0 : i32
    %c0_i32_0 = arith.constant 0 : i32
    return %arg0, %c0_i32 : i32, i32
  }
  func.func @transform_1(%arg0: i32) -> (i32, i32) {
    %c0_i32 = arith.constant 0 : i32
    %c0_i32_0 = arith.constant 0 : i32
    %c0_i32_1 = arith.constant 0 : i32
    return %c0_i32, %c0_i32_0 : i32, i32
  }
  func.func @transform_2(%arg0: i32) -> (i32, i32) {
    %c0_i32 = arith.constant 0 : i32
    %c0_i32_0 = arith.constant 0 : i32
    %c0_i32_1 = arith.constant 0 : i32
    return %c0_i32, %c0_i32_0 : i32, i32
  }
  func.func @transform_3(%arg0: i32) -> (i32, i32) {
    %c0_i32 = arith.constant 0 : i32
    %c0_i32_0 = arith.constant 0 : i32
    return %arg0, %c0_i32 : i32, i32
  }
}

module attributes {stable_mosaic.version = 11 : i64} {
  func.func @_fused_classifier_kernel(%arg0: i32, %arg1: memref<8x128xf32, #tpu.memory_space<vmem>>, %arg2: memref<128x128xf32, #tpu.memory_space<vmem>>, %arg3: memref<1x128xf32, #tpu.memory_space<vmem>>, %arg4: memref<8x128xf32, #tpu.memory_space<vmem>>) attributes {dimension_semantics = [#tpu.dimension_semantics<parallel>], iteration_bounds = array<i64: 1>, scalar_prefetch = 0 : i64, scratch_operands = 0 : i64, tpu.core_type = #tpu.core_type<tc>, window_params = [{transform_indices = @transform_0, window_bounds = array<i64: 8, 128>}, {pipeline_mode = #tpu.pipeline_mode<synchronous>, transform_indices = @transform_1, window_bounds = array<i64: 128, 128>}, {pipeline_mode = #tpu.pipeline_mode<synchronous>, transform_indices = @transform_2, window_bounds = array<i64: 1, 128>}, {transform_indices = @transform_3, window_bounds = array<i64: 8, 128>}]} {
    %c0 = arith.constant 0 : index
    %c0_0 = arith.constant 0 : index
    %0 = vector.load %arg1[%c0, %c0_0] : memref<8x128xf32, #tpu.memory_space<vmem>>, vector<8x128xf32>
    %c0_1 = arith.constant 0 : index
    %c0_2 = arith.constant 0 : index
    %1 = vector.load %arg2[%c0_1, %c0_2] : memref<128x128xf32, #tpu.memory_space<vmem>>, vector<128x128xf32>
    %cst = arith.constant dense<0.000000e+00> : vector<8x128xf32>
    %2 = tpu.matmul %0, %1, %cst {dimension_numbers = #tpu.dot_dimension_numbers<[1], [0], [0], [1], [0, 0, 1, 1], [], []>} : vector<8x128xf32>, vector<128x128xf32>, vector<8x128xf32> -> vector<8x128xf32>
    %c0_3 = arith.constant 0 : index
    %c0_4 = arith.constant 0 : index
    %3 = vector.load %arg3[%c0_3, %c0_4] : memref<1x128xf32, #tpu.memory_space<vmem>>, vector<1x128xf32>
    %4 = vector.broadcast %3 : vector<1x128xf32> to vector<8x128xf32>
    %5 = arith.addf %2, %4 : vector<8x128xf32>
    %c0_5 = arith.constant 0 : index
    %c0_6 = arith.constant 0 : index
    %6 = vector.load %arg4[%c0_5, %c0_6] : memref<8x128xf32, #tpu.memory_space<vmem>>, vector<8x128xf32>
    tpu.vector_store %arg4[%c0_5, %c0_6], %5 {strides = array<i32>} : memref<8x128xf32, #tpu.memory_space<vmem>>, vector<8x128xf32>,
    return
  }
  func.func @transform_0(%arg0: i32) -> (i32, i32) {
    %c0_i32 = arith.constant 0 : i32
    %c0_i32_0 = arith.constant 0 : i32
    return %arg0, %c0_i32 : i32, i32
  }
  func.func @transform_1(%arg0: i32) -> (i32, i32) {
    %c0_i32 = arith.constant 0 : i32
    %c0_i32_0 = arith.constant 0 : i32
    %c0_i32_1 = arith.constant 0 : i32
    return %c0_i32, %c0_i32_0 : i32, i32
  }
  func.func @transform_2(%arg0: i32) -> (i32, i32) {
    %c0_i32 = arith.constant 0 : i32
    %c0_i32_0 = arith.constant 0 : i32
    %c0_i32_1 = arith.constant 0 : i32
    return %c0_i32, %c0_i32_0 : i32, i32
  }
  func.func @transform_3(%arg0: i32) -> (i32, i32) {
    %c0_i32 = arith.constant 0 : i32
    %c0_i32_0 = arith.constant 0 : i32
    return %arg0, %c0_i32 : i32, i32
  }
}

</mosaic_0001>

<llo_original>
// kernel: tpu_custom_call.1
$region0: #{tpu_custom_call.1}
  #allocation0 [shape = 'u32[]', space=smem, size = 0x4, offset = 0x4, fixed_abs, tag = 'smem constant byte address 0x4 - core index']
  #allocation1 [shape = 'u32[144,128]{1,0:T(1,128)}', space=vmem, size = 0x12000, scoped, tag = 'internal scratch']
  %s0 = inlined_call_operand.hbm [shape: f32[8,128], index: 0, kind: input, shape index: {}]
  %s1 = inlined_call_operand.hbm [shape: f32[128,128], index: 1, kind: input, shape index: {}]
  %s2 = inlined_call_operand.vmem [shape: f32[1,128], index: 2, kind: input, shape index: {}]
  %s3 = inlined_call_operand.hbm [shape: f32[8,128], index: 3, kind: output, shape index: {}]
  %s4 = sld [smem:[#allocation0]]
  $region30: #{tpu_custom_call.1} parent=0
    _
  %s6 = ssub.s32 1, %s4
  %s7 = scalar_select 0, %s6, %s4
  $region1: #{tpu_custom_call.1} parent=0
    #allocation2 [shape = 'u8[4096]{0}', space=vmem, size = 0x1000, scoped, tag = 'input window, operand 0, single buffered']
    #allocation3 [shape = 's32[1]{0}', space=sflag, size = 0x4, scoped, tag = 'scoped memory for tpu_custom_call.1']
    #allocation4 [shape = 's32[1]{0}', space=sflag, size = 0x4, scoped, tag = 'scoped memory for tpu_custom_call.1']
    #allocation5 [shape = 'u8[65536]{0}', space=vmem, size = 0x10000, scoped, tag = 'input window, operand 1, single buffered']
    #allocation6 [shape = 's32[1]{0}', space=sflag, size = 0x4, scoped, tag = 'scoped memory for tpu_custom_call.1']
    #allocation7 [shape = 'u8[4096]{0}', space=vmem, size = 0x1000, scoped, tag = 'output window, operand 0, single buffered']
    %8 = vsyncpa [#allocation3], 0
    %9 = vsyncpa [#allocation6], 0
    %10 = vsyncpa [#allocation4], 0
    // Predicated region
    $region2: #{tpu_custom_call.1} parent=1 // pred_check
      _
    $region3: #{tpu_custom_call.1} parent=1 // pred_check_branch
      %12 = sbr.rel (0) target = $region5
    $region4: #{tpu_custom_call.1} parent=1 // pred_region
      %s14 = ssub.s32 128, 128
      %15 = vsyncadd [#allocation3], %s14
      %s17 = sshll.u32 [#allocation2], 4
      %s18 = int_to_ptr.vmem [resolvable:$true] %s17
      %20 = dma.hbm_to_vmem [thread:$0]  %s0, 128, %s18, [#allocation3]
    $region5: #{tpu_custom_call.1} parent=1 // pred_fallthru
      _
    // Predicated region
    $region6: #{tpu_custom_call.1} parent=1 // pred_check
      _
    $region7: #{tpu_custom_call.1} parent=1 // pred_check_branch
      %22 = sbr.rel (0) target = $region9
    $region8: #{tpu_custom_call.1} parent=1 // pred_region
      %s24 = ssub.s32 2048, 2048
      %25 = vsyncadd [#allocation6], %s24
      %s26 = sshll.u32 [#allocation5], 4
      %s27 = int_to_ptr.vmem [resolvable:$true] %s26
      %32 = dma.hbm_to_vmem [thread:$0]  %s1, 2048, %s27, [#allocation6], 128, 128, 8
    $region9: #{tpu_custom_call.1} parent=1 // pred_fallthru
      _
    // Predicated region
    $region10: #{tpu_custom_call.1} parent=1 // pred_check
      _
    $region11: #{tpu_custom_call.1} parent=1 // pred_check_branch
      %34 = sbr.rel (0) target = $region13
    $region12: #{tpu_custom_call.1} parent=1 // pred_region
      _
    $region13: #{tpu_custom_call.1} parent=1 // pred_fallthru
      _
    // Predicated region
    $region14: #{tpu_custom_call.1} parent=1 // pred_check
      _
    $region15: #{tpu_custom_call.1} parent=1 // pred_check_branch
      %36 = sbr.rel (0) target = $region17
    $region16: #{tpu_custom_call.1} parent=1 // pred_region
      %37 = dma.done [#allocation3], 128
    $region17: #{tpu_custom_call.1} parent=1 // pred_fallthru
      _
    // Predicated region
    $region18: #{tpu_custom_call.1} parent=1 // pred_check
      _
    $region19: #{tpu_custom_call.1} parent=1 // pred_check_branch
      %39 = sbr.rel (0) target = $region21
    $region20: #{tpu_custom_call.1} parent=1 // pred_region
      %40 = dma.done [#allocation6], 2048
    $region21: #{tpu_custom_call.1} parent=1 // pred_fallthru
      _
    %v41 = vld [vmem:[#allocation2] sm:$0xff]
    %v42 = vld [vmem:[#allocation5] sm:$0xff]
    %v43 = vld [vmem:[#allocation5 + $0x8] sm:$0xff]
    %v44 = vld [vmem:[#allocation5 + $0x10] sm:$0xff]
    %v45 = vld [vmem:[#allocation5 + $0x18] sm:$0xff]
    %v46 = vld [vmem:[#allocation5 + $0x20] sm:$0xff]
    %v47 = vld [vmem:[#allocation5 + $0x28] sm:$0xff]
    %v48 = vld [vmem:[#allocation5 + $0x30] sm:$0xff]
    %v49 = vld [vmem:[#allocation5 + $0x38] sm:$0xff]
    %v50 = vld [vmem:[#allocation5 + $0x40] sm:$0xff]
    %v51 = vld [vmem:[#allocation5 + $0x48] sm:$0xff]
    %v52 = vld [vmem:[#allocation5 + $0x50] sm:$0xff]
    %v53 = vld [vmem:[#allocation5 + $0x58] sm:$0xff]
    %v54 = vld [vmem:[#allocation5 + $0x60] sm:$0xff]
    %v55 = vld [vmem:[#allocation5 + $0x68] sm:$0xff]
    %v56 = vld [vmem:[#allocation5 + $0x70] sm:$0xff]
    %v57 = vld [vmem:[#allocation5 + $0x78] sm:$0xff]
    %v58 = vld [vmem:[%s2] sm:$0x1]
    %v60 = vlaneseq
    %v61 = vshrl.u32 %v60, 7
    %v62 = vsub.s32 0, %v61
    %v63 = vrot.slane %v58, %v62
    %65 = vmatprep.subr.mxu0 0.0
    %66 = vmatpush1.msra.mxu0 %v42
    %67 = vmatprep.subr.mxu0 0.0
    %68 = vmatpush1.msra.mxu0 %v43
    %69 = vmatprep.subr.mxu0 0.0
    %70 = vmatpush1.msra.mxu0 %v44
    %71 = vmatprep.subr.mxu0 0.0
    %72 = vmatpush1.msra.mxu0 %v45
    %73 = vmatprep.subr.mxu0 0.0
    %74 = vmatpush1.msra.mxu0 %v46
    %75 = vmatprep.subr.mxu0 0.0
    %76 = vmatpush1.msra.mxu0 %v47
    %77 = vmatprep.subr.mxu0 0.0
    %78 = vmatpush1.msra.mxu0 %v48
    %79 = vmatprep.subr.mxu0 0.0
    %80 = vmatpush1.msra.mxu0 %v49
    %81 = vmatprep.subr.mxu0 0.0
    %82 = vmatpush1.msra.mxu0 %v50
    %83 = vmatprep.subr.mxu0 0.0
    %84 = vmatpush1.msra.mxu0 %v51
    %85 = vmatprep.subr.mxu0 0.0
    %86 = vmatpush1.msra.mxu0 %v52
    %87 = vmatprep.subr.mxu0 0.0
    %88 = vmatpush1.msra.mxu0 %v53
    %89 = vmatprep.subr.mxu0 0.0
    %90 = vmatpush1.msra.mxu0 %v54
    %91 = vmatprep.subr.mxu0 0.0
    %92 = vmatpush1.msra.mxu0 %v55
    %93 = vmatprep.subr.mxu0 0.0
    %94 = vmatpush1.msra.mxu0 %v56
    %95 = vmatprep.subr.mxu0 0.0
    %96 = vmatpush1.msra.mxu0 %v57
    %97 = vmatprep.subr.mxu0 0.0
    %98 = vmatpush1.msra.mxu0 0.0
    %99 = vmatprep.subr.mxu0 0.0
    %100 = vmatpush1.msra.mxu0 0.0
    %101 = vmatprep.subr.mxu0 0.0
    %102 = vmatpush1.msra.mxu0 0.0
    %103 = vmatprep.subr.mxu0 0.0
    %104 = vmatpush1.msra.mxu0 0.0
    %105 = vmatprep.subr.mxu0 0.0
    %106 = vmatpush1.msra.mxu0 0.0
    %107 = vmatprep.subr.mxu0 0.0
    %108 = vmatpush1.msra.mxu0 0.0
    %109 = vmatprep.subr.mxu0 0.0
    %110 = vmatpush1.msra.mxu0 0.0
    %111 = vmatprep.subr.mxu0 0.0
    %112 = vmatpush1.msra.mxu0 0.0
    %113 = vmatprep.subr.mxu0 0.0
    %114 = vmatpush1.msra.mxu0 0.0
    %115 = vmatprep.subr.mxu0 0.0
    %116 = vmatpush1.msra.mxu0 0.0
    %117 = vmatprep.subr.mxu0 0.0
    %118 = vmatpush1.msra.mxu0 0.0
    %119 = vmatprep.subr.mxu0 0.0
    %120 = vmatpush1.msra.mxu0 0.0
    %121 = vmatprep.subr.mxu0 0.0
    %122 = vmatpush1.msra.mxu0 0.0
    %123 = vmatprep.subr.mxu0 0.0
    %124 = vmatpush1.msra.mxu0 0.0
    %125 = vmatprep.subr.mxu0 0.0
    %126 = vmatpush1.msra.mxu0 0.0
    %127 = vmatprep.subr.mxu0 0.0
    %128 = vmatpush1.msra.mxu0 0.0
    %129 = vmatprep.mubr.f32.mxu0 0.0
    %130 = vmatmul.mubr.f32.gmra.mrb[0].mxu0 %v41
    %v131 = vpop.f32.mrb[0].mxu0
    %v132 = vadd.f32 %v63, %v131
    %v133 = vpop.f32.mrb[0].mxu0
    %134 = vdwg.mxu0
    %135 = vst [vmem:[#allocation7] sm:$0xff] %v132
    // Predicated region
    $region22: #{tpu_custom_call.1} parent=1 // pred_check
      _
    $region23: #{tpu_custom_call.1} parent=1 // pred_check_branch
      %137 = sbr.rel (0) target = $region25
    $region24: #{tpu_custom_call.1} parent=1 // pred_region
      %s139 = ssub.s32 128, 128
      %140 = vsyncadd [#allocation4], %s139
      %s142 = sshll.u32 [#allocation7], 4
      %s143 = int_to_ptr.vmem [resolvable:$true] %s142
      %145 = dma.vmem_to_hbm [thread:$0]  %s143, 128, %s3, [#allocation4]
    $region25: #{tpu_custom_call.1} parent=1 // pred_fallthru
      _
    // Predicated region
    $region26: #{tpu_custom_call.1} parent=1 // pred_check
      _
    $region27: #{tpu_custom_call.1} parent=1 // pred_check_branch
      %147 = sbr.rel (0) target = $region29
    $region28: #{tpu_custom_call.1} parent=1 // pred_region
      %148 = dma.done [#allocation4], 128
    $region29: #{tpu_custom_call.1} parent=1 // pred_fallthru
      _
    %149 = vsyncpa [#allocation3], 1
    %150 = vsyncpa [#allocation6], 1
    %151 = vsyncpa [#allocation4], 1

// kernel: tpu_custom_call.1
$region0: #{tpu_custom_call.1}
  #allocation0 [shape = 'u32[]', space=smem, size = 0x4, offset = 0x4, fixed_abs, tag = 'smem constant byte address 0x4 - core index']
  #allocation1 [shape = 'u32[144,128]{1,0:T(1,128)}', space=vmem, size = 0x12000, scoped, tag = 'internal scratch']
  %s0 = inlined_call_operand.hbm [shape: f32[8,128], index: 0, kind: input, shape index: {}]
  %s1 = inlined_call_operand.hbm [shape: f32[128,128], index: 1, kind: input, shape index: {}]
  %s2 = inlined_call_operand.vmem [shape: f32[1,128], index: 2, kind: input, shape index: {}]
  %s3 = inlined_call_operand.hbm [shape: f32[8,128], index: 3, kind: output, shape index: {}]
  %s4 = sld [smem:[#allocation0]]
  $region30: #{tpu_custom_call.1} parent=0
    _
  %s6 = ssub.s32 1, %s4
  %s7 = scalar_select 0, %s6, %s4
  $region1: #{tpu_custom_call.1} parent=0
    #allocation2 [shape = 'u8[4096]{0}', space=vmem, size = 0x1000, scoped, tag = 'input window, operand 0, single buffered']
    #allocation3 [shape = 's32[1]{0}', space=sflag, size = 0x4, scoped, tag = 'scoped memory for tpu_custom_call.1']
    #allocation4 [shape = 's32[1]{0}', space=sflag, size = 0x4, scoped, tag = 'scoped memory for tpu_custom_call.1']
    #allocation5 [shape = 'u8[65536]{0}', space=vmem, size = 0x10000, scoped, tag = 'input window, operand 1, single buffered']
    #allocation6 [shape = 's32[1]{0}', space=sflag, size = 0x4, scoped, tag = 'scoped memory for tpu_custom_call.1']
    #allocation7 [shape = 'u8[4096]{0}', space=vmem, size = 0x1000, scoped, tag = 'output window, operand 0, single buffered']
    %8 = vsyncpa [#allocation3], 0
    %9 = vsyncpa [#allocation6], 0
    %10 = vsyncpa [#allocation4], 0
    // Predicated region
    $region2: #{tpu_custom_call.1} parent=1 // pred_check
      _
    $region3: #{tpu_custom_call.1} parent=1 // pred_check_branch
      %12 = sbr.rel (0) target = $region5
    $region4: #{tpu_custom_call.1} parent=1 // pred_region
      %s14 = ssub.s32 128, 128
      %15 = vsyncadd [#allocation3], %s14
      %s17 = sshll.u32 [#allocation2], 4
      %s18 = int_to_ptr.vmem [resolvable:$true] %s17
      %20 = dma.hbm_to_vmem [thread:$0]  %s0, 128, %s18, [#allocation3]
    $region5: #{tpu_custom_call.1} parent=1 // pred_fallthru
      _
    // Predicated region
    $region6: #{tpu_custom_call.1} parent=1 // pred_check
      _
    $region7: #{tpu_custom_call.1} parent=1 // pred_check_branch
      %22 = sbr.rel (0) target = $region9
    $region8: #{tpu_custom_call.1} parent=1 // pred_region
      %s24 = ssub.s32 2048, 2048
      %25 = vsyncadd [#allocation6], %s24
      %s26 = sshll.u32 [#allocation5], 4
      %s27 = int_to_ptr.vmem [resolvable:$true] %s26
      %32 = dma.hbm_to_vmem [thread:$0]  %s1, 2048, %s27, [#allocation6], 128, 128, 8
    $region9: #{tpu_custom_call.1} parent=1 // pred_fallthru
      _
    // Predicated region
    $region10: #{tpu_custom_call.1} parent=1 // pred_check
      _
    $region11: #{tpu_custom_call.1} parent=1 // pred_check_branch
      %34 = sbr.rel (0) target = $region13
    $region12: #{tpu_custom_call.1} parent=1 // pred_region
      _
    $region13: #{tpu_custom_call.1} parent=1 // pred_fallthru
      _
    // Predicated region
    $region14: #{tpu_custom_call.1} parent=1 // pred_check
      _
    $region15: #{tpu_custom_call.1} parent=1 // pred_check_branch
      %36 = sbr.rel (0) target = $region17
    $region16: #{tpu_custom_call.1} parent=1 // pred_region
      %37 = dma.done [#allocation3], 128
    $region17: #{tpu_custom_call.1} parent=1 // pred_fallthru
      _
    // Predicated region
    $region18: #{tpu_custom_call.1} parent=1 // pred_check
      _
    $region19: #{tpu_custom_call.1} parent=1 // pred_check_branch
      %39 = sbr.rel (0) target = $region21
    $region20: #{tpu_custom_call.1} parent=1 // pred_region
      %40 = dma.done [#allocation6], 2048
    $region21: #{tpu_custom_call.1} parent=1 // pred_fallthru
      _
    %v41 = vld [vmem:[#allocation2] sm:$0xff]
    %v42 = vld [vmem:[#allocation5] sm:$0xff]
    %v43 = vld [vmem:[#allocation5 + $0x8] sm:$0xff]
    %v44 = vld [vmem:[#allocation5 + $0x10] sm:$0xff]
    %v45 = vld [vmem:[#allocation5 + $0x18] sm:$0xff]
    %v46 = vld [vmem:[#allocation5 + $0x20] sm:$0xff]
    %v47 = vld [vmem:[#allocation5 + $0x28] sm:$0xff]
    %v48 = vld [vmem:[#allocation5 + $0x30] sm:$0xff]
    %v49 = vld [vmem:[#allocation5 + $0x38] sm:$0xff]
    %v50 = vld [vmem:[#allocation5 + $0x40] sm:$0xff]
    %v51 = vld [vmem:[#allocation5 + $0x48] sm:$0xff]
    %v52 = vld [vmem:[#allocation5 + $0x50] sm:$0xff]
    %v53 = vld [vmem:[#allocation5 + $0x58] sm:$0xff]
    %v54 = vld [vmem:[#allocation5 + $0x60] sm:$0xff]
    %v55 = vld [vmem:[#allocation5 + $0x68] sm:$0xff]
    %v56 = vld [vmem:[#allocation5 + $0x70] sm:$0xff]
    %v57 = vld [vmem:[#allocation5 + $0x78] sm:$0xff]
    %v58 = vld [vmem:[%s2] sm:$0x1]
    %v60 = vlaneseq
    %v61 = vshrl.u32 %v60, 7
    %v62 = vsub.s32 0, %v61
    %v63 = vrot.slane %v58, %v62
    %65 = vmatprep.subr.mxu0 0.0
    %66 = vmatpush1.msra.mxu0 %v42
    %67 = vmatprep.subr.mxu0 0.0
    %68 = vmatpush1.msra.mxu0 %v43
    %69 = vmatprep.subr.mxu0 0.0
    %70 = vmatpush1.msra.mxu0 %v44
    %71 = vmatprep.subr.mxu0 0.0
    %72 = vmatpush1.msra.mxu0 %v45
    %73 = vmatprep.subr.mxu0 0.0
    %74 = vmatpush1.msra.mxu0 %v46
    %75 = vmatprep.subr.mxu0 0.0
    %76 = vmatpush1.msra.mxu0 %v47
    %77 = vmatprep.subr.mxu0 0.0
    %78 = vmatpush1.msra.mxu0 %v48
    %79 = vmatprep.subr.mxu0 0.0
    %80 = vmatpush1.msra.mxu0 %v49
    %81 = vmatprep.subr.mxu0 0.0
    %82 = vmatpush1.msra.mxu0 %v50
    %83 = vmatprep.subr.mxu0 0.0
    %84 = vmatpush1.msra.mxu0 %v51
    %85 = vmatprep.subr.mxu0 0.0
    %86 = vmatpush1.msra.mxu0 %v52
    %87 = vmatprep.subr.mxu0 0.0
    %88 = vmatpush1.msra.mxu0 %v53
    %89 = vmatprep.subr.mxu0 0.0
    %90 = vmatpush1.msra.mxu0 %v54
    %91 = vmatprep.subr.mxu0 0.0
    %92 = vmatpush1.msra.mxu0 %v55
    %93 = vmatprep.subr.mxu0 0.0
    %94 = vmatpush1.msra.mxu0 %v56
    %95 = vmatprep.subr.mxu0 0.0
    %96 = vmatpush1.msra.mxu0 %v57
    %97 = vmatprep.subr.mxu0 0.0
    %98 = vmatpush1.msra.mxu0 0.0
    %99 = vmatprep.subr.mxu0 0.0
    %100 = vmatpush1.msra.mxu0 0.0
    %101 = vmatprep.subr.mxu0 0.0
    %102 = vmatpush1.msra.mxu0 0.0
    %103 = vmatprep.subr.mxu0 0.0
    %104 = vmatpush1.msra.mxu0 0.0
    %105 = vmatprep.subr.mxu0 0.0
    %106 = vmatpush1.msra.mxu0 0.0
    %107 = vmatprep.subr.mxu0 0.0
    %108 = vmatpush1.msra.mxu0 0.0
    %109 = vmatprep.subr.mxu0 0.0
    %110 = vmatpush1.msra.mxu0 0.0
    %111 = vmatprep.subr.mxu0 0.0
    %112 = vmatpush1.msra.mxu0 0.0
    %113 = vmatprep.subr.mxu0 0.0
    %114 = vmatpush1.msra.mxu0 0.0
    %115 = vmatprep.subr.mxu0 0.0
    %116 = vmatpush1.msra.mxu0 0.0
    %117 = vmatprep.subr.mxu0 0.0
    %118 = vmatpush1.msra.mxu0 0.0
    %119 = vmatprep.subr.mxu0 0.0
    %120 = vmatpush1.msra.mxu0 0.0
    %121 = vmatprep.subr.mxu0 0.0
    %122 = vmatpush1.msra.mxu0 0.0
    %123 = vmatprep.subr.mxu0 0.0
    %124 = vmatpush1.msra.mxu0 0.0
    %125 = vmatprep.subr.mxu0 0.0
    %126 = vmatpush1.msra.mxu0 0.0
    %127 = vmatprep.subr.mxu0 0.0
    %128 = vmatpush1.msra.mxu0 0.0
    %129 = vmatprep.mubr.f32.mxu0 0.0
    %130 = vmatmul.mubr.f32.gmra.mrb[0].mxu0 %v41
    %v131 = vpop.f32.mrb[0].mxu0
    %v132 = vadd.f32 %v63, %v131
    %v133 = vpop.f32.mrb[0].mxu0
    %134 = vdwg.mxu0
    %135 = vst [vmem:[#allocation7] sm:$0xff] %v132
    // Predicated region
    $region22: #{tpu_custom_call.1} parent=1 // pred_check
      _
    $region23: #{tpu_custom_call.1} parent=1 // pred_check_branch
      %137 = sbr.rel (0) target = $region25
    $region24: #{tpu_custom_call.1} parent=1 // pred_region
      %s139 = ssub.s32 128, 128
      %140 = vsyncadd [#allocation4], %s139
      %s142 = sshll.u32 [#allocation7], 4
      %s143 = int_to_ptr.vmem [resolvable:$true] %s142
      %145 = dma.vmem_to_hbm [thread:$0]  %s143, 128, %s3, [#allocation4]
    $region25: #{tpu_custom_call.1} parent=1 // pred_fallthru
      _
    // Predicated region
    $region26: #{tpu_custom_call.1} parent=1 // pred_check
      _
    $region27: #{tpu_custom_call.1} parent=1 // pred_check_branch
      %147 = sbr.rel (0) target = $region29
    $region28: #{tpu_custom_call.1} parent=1 // pred_region
      %148 = dma.done [#allocation4], 128
    $region29: #{tpu_custom_call.1} parent=1 // pred_fallthru
      _
    %149 = vsyncpa [#allocation3], 1
    %150 = vsyncpa [#allocation6], 1
    %151 = vsyncpa [#allocation4], 1

</llo_original>
